<compile_context>
chip_gen: v7x
topology: tpu7x:2x2x1
jax: 0.10.0
libtpu: 0.0.40
codegen_flags: <defaults>
</compile_context>

<pallas_src>
import jax
import jax.numpy as jnp
from jax.experimental import pallas as pl
from jax.experimental.pallas import tpu as pltpu

_LANES = 1024                           # 8 sublanes * 128 lanes (lane-dense width)
_TARGET_BLOCK_BYTES = 6 * 1024 * 1024   # per-direction block; 4 buffers ~= 24 MiB VMEM
_VMEM_LIMIT_BYTES = 40 * 1024 * 1024    # < 64 MiB physical on v7x, plenty on v5e/v6e
_SPLIT_MIN_BYTES = 2 * 1024 * 1024      # split single-block grids >= this into 2 blocks


def _sublane_multiple(dtype) -> int:
    # Block-row alignment: f32 -> 8, bf16/f16 -> 16, int8/fp8 -> 32.
    return max(8, 32 // jnp.dtype(dtype).itemsize)


def _scale_kernel(scale_ref, x_ref, o_ref):
    # scale_ref: (1,) f32 scalar in SMEM; x_ref/o_ref: (tile_r, _LANES) VMEM tiles.
    # Multiply in the tile's native dtype (bf16 stays bf16: half the vreg
    # footprint vs. upcasting to f32). Exact no-op cast for f32 inputs.
    o_ref[...] = x_ref[...] * scale_ref[0].astype(o_ref.dtype)


@jax.jit
def scale_forward(x: jax.Array, scale: jax.Array) -> jax.Array:
    """y = x * scale, with the multiply executed in a tiled Pallas TPU kernel."""
    orig_shape = x.shape
    orig_dtype = x.dtype
    n = x.size
    scale_f32 = jnp.asarray(scale, dtype=jnp.float32)

    # Fallback: empty, tiny, or not lane-dense-reshapeable tensors. Plain
    # `x * scale` is already HBM-roofline under XLA and avoids both the
    # pallas_call boundary cost and any pad/slice HBM round-trips.
    # Note: output is kept in x.dtype (matches the kernel path); strict torch
    # promotion (bf16 x * f32 param -> f32) is intentionally not reproduced.
    if n == 0 or n < _LANES or n % _LANES != 0:
        return (x * scale_f32).astype(orig_dtype)

    itemsize = jnp.dtype(orig_dtype).itemsize
    sub = _sublane_multiple(orig_dtype)
    rows = n // _LANES

    target_rows = max(sub, (_TARGET_BLOCK_BYTES // (_LANES * itemsize)) // sub * sub)
    if rows > target_rows:
        tile_r = target_rows                              # multi-block grid; last block ragged
    elif rows >= 2 * sub and n * itemsize >= _SPLIT_MIN_BYTES:
        # Keep >= 2 grid blocks so the "parallel" axis can use both v7x TCs.
        half = -(-rows // 2)                              # ceil(rows / 2)
        tile_r = min(-(-half // sub) * sub, rows)         # round up to sublane multiple
    else:
        tile_r = rows                                     # single block == full array rows

    grid = (pl.cdiv(rows, tile_r),)

    x2d = x.reshape(rows, _LANES)                         # contiguous reshape: layout-free
    scale_smem = scale_f32.reshape((1,))

    out2d = pl.pallas_call(
        _scale_kernel,
        out_shape=jax.ShapeDtypeStruct((rows, _LANES), orig_dtype),
        grid=grid,
        in_specs=[
            pl.BlockSpec(memory_space=pltpu.SMEM),            # scalar parameter (f32)
            pl.BlockSpec((tile_r, _LANES), lambda i: (i, 0)),  # pipelined input tiles
        ],
        out_specs=pl.BlockSpec((tile_r, _LANES), lambda i: (i, 0)),
        compiler_params=pltpu.CompilerParams(
            dimension_semantics=("parallel",),   # shard blocks over both TCs on v7x
            vmem_limit_bytes=_VMEM_LIMIT_BYTES,  # 4 x 6 MiB buffers need > default scoped limit
        ),
        cost_estimate=pl.CostEstimate(
            flops=n, transcendentals=0, bytes_accessed=2 * n * itemsize),
    )(scale_smem, x2d)

    return out2d.reshape(orig_shape)


class Scale:
    """JAX mirror of the PyTorch `Scale` module."""

    def __init__(self, init_val: float = 1.0, dtype=jnp.float32):
        # Matches nn.Parameter(torch.tensor(init_val)).
        self.scale = jnp.asarray(init_val, dtype=dtype)

    def __call__(self, x: jax.Array) -> jax.Array:
        return scale_forward(x, self.scale)


if __name__ == "__main__":
    key = jax.random.PRNGKey(0)
    # NCHW input, as a RetinaNet head feature map would be (n % 1024 == 0 ->
    # exercises the Pallas kernel path).
    x = jax.random.normal(key, (2, 4, 16, 16), dtype=jnp.float32)

    module = Scale(init_val=1.0)
    module.scale = jnp.asarray(1.5, dtype=jnp.float32)   # non-trivial scale

    y = module(x)
    jax.block_until_ready(y)
    assert y.shape == x.shape and y.dtype == x.dtype
    assert jnp.allclose(y, x * 1.5, atol=1e-6, rtol=1e-6)

    # Misaligned size exercises the no-pad fallback path (plain x * scale).
    x2 = jax.random.normal(jax.random.PRNGKey(1), (2, 3, 7, 5), dtype=jnp.float32)
    y2 = module(x2)
    jax.block_until_ready(y2)
    assert y2.shape == x2.shape and y2.dtype == x2.dtype
    assert jnp.allclose(y2, x2 * 1.5, atol=1e-6, rtol=1e-6)

    print("KERNEL_OK")
</pallas_src>

<mosaic_0001>
module attributes {stable_mosaic.version = 11 : i64} {
  func.func @_scale_kernel(%arg0: i32, %arg1: memref<1xf32, #tpu.memory_space<smem>>, %arg2: memref<2x1024xf32, #tpu.memory_space<vmem>>, %arg3: memref<2x1024xf32, #tpu.memory_space<vmem>>) attributes {dimension_semantics = [#tpu.dimension_semantics<parallel>], iteration_bounds = array<i64: 1>, scalar_prefetch = 0 : i64, scratch_operands = 0 : i64, tpu.core_type = #tpu.core_type<tc>, window_params = [{transform_indices = @transform_0, window_bounds = array<i64: 1>}, {transform_indices = @transform_1, window_bounds = array<i64: 2, 1024>}, {transform_indices = @transform_2, window_bounds = array<i64: 2, 1024>}]} {
    %c0 = arith.constant 0 : index
    %c0_0 = arith.constant 0 : index
    %0 = vector.load %arg2[%c0, %c0_0] : memref<2x1024xf32, #tpu.memory_space<vmem>>, vector<2x1024xf32>
    %c0_1 = arith.constant 0 : index
    %1 = memref.load %arg1[%c0_1] : memref<1xf32, #tpu.memory_space<smem>>
    %2 = vector.broadcast %1 : f32 to vector<2x1024xf32>
    %3 = arith.mulf %0, %2 : vector<2x1024xf32>
    %c0_2 = arith.constant 0 : index
    %c0_3 = arith.constant 0 : index
    %4 = vector.load %arg3[%c0_2, %c0_3] : memref<2x1024xf32, #tpu.memory_space<vmem>>, vector<2x1024xf32>
    tpu.vector_store %arg3[%c0_2, %c0_3], %3 {strides = array<i32>} : memref<2x1024xf32, #tpu.memory_space<vmem>>, vector<2x1024xf32>,
    return
  }
  func.func @transform_0(%arg0: i32) -> i32 {
    %c0_i32 = arith.constant 0 : i32
    %c0_i32_0 = arith.constant 0 : i32
    return %c0_i32 : i32
  }
  func.func @transform_1(%arg0: i32) -> (i32, i32) {
    %c0_i32 = arith.constant 0 : i32
    %c0_i32_0 = arith.constant 0 : i32
    return %arg0, %c0_i32 : i32, i32
  }
  func.func @transform_2(%arg0: i32) -> (i32, i32) {
    %c0_i32 = arith.constant 0 : i32
    %c0_i32_0 = arith.constant 0 : i32
    return %arg0, %c0_i32 : i32, i32
  }
}

</mosaic_0001>

<llo_original>
// kernel: scale_forward.1
$region0: #{scale_forward.1}
  #allocation0 [shape = 'u32[]', space=smem, size = 0x4, offset = 0x4, fixed_abs, tag = 'smem constant byte address 0x4 - core index']
  #allocation1 [shape = 'u32[144,128]{1,0:T(1,128)}', space=vmem, size = 0x12000, scoped, tag = 'internal scratch']
  #allocation2 [shape = 'f32[1]{0:T(128)S(6)}', space=smem, size = 0x200, scoped, tag = 'scoped memory for scale_forward.1']
  %s0 = inlined_call_operand.<no memory space> [shape: f32[1], index: 0, kind: input, shape index: {}]
  %s1 = inlined_call_operand.vmem [shape: f32[2,1024], index: 1, kind: input, shape index: {}]
  %s2 = inlined_call_operand.vmem [shape: f32[2,1024], index: 2, kind: output, shape index: {}]
  %s3 = sld [smem:[#allocation0]]
  $region18: #{scale_forward.1} parent=0
    _
  %s5 = ssub.s32 1, %s3
  %s6 = scalar_select 0, %s5, %s3
  %7 = sst [smem:[#allocation2]] %s0
  // Predicated region
  $region2: #{scale_forward.1} parent=0 // pred_check
    _
  $region3: #{scale_forward.1} parent=0 // pred_check_branch
    %9 = sbr.rel (0) target = $region5
  $region4: #{scale_forward.1} parent=0 // pred_region
    _
  $region5: #{scale_forward.1} parent=0 // pred_fallthru
    _
  // Predicated region
  $region6: #{scale_forward.1} parent=0 // pred_check
    _
  $region7: #{scale_forward.1} parent=0 // pred_check_branch
    %11 = sbr.rel (0) target = $region9
  $region8: #{scale_forward.1} parent=0 // pred_region
    _
  $region9: #{scale_forward.1} parent=0 // pred_fallthru
    _
  %v12 = vld [vmem:[%s1] sm:$0xff]
  %v13 = vld [vmem:[%s1 + $0x8] sm:$0xff]
  %s14 = sld [smem:[#allocation2]]
  %v15 = vstv %s14
  %v16 = vmul.f32 %v12, %v15
  %v17 = vmul.f32 %v13, %v15
  %18 = vst [vmem:[%s2] sm:$0xff] %v16
  %19 = vst [vmem:[%s2 + $0x8] sm:$0xff] %v17
  // Predicated region
  $region10: #{scale_forward.1} parent=0 // pred_check
    _
  $region11: #{scale_forward.1} parent=0 // pred_check_branch
    %21 = sbr.rel (0) target = $region13
  $region12: #{scale_forward.1} parent=0 // pred_region
    _
  $region13: #{scale_forward.1} parent=0 // pred_fallthru
    _
  // Predicated region
  $region14: #{scale_forward.1} parent=0 // pred_check
    _
  $region15: #{scale_forward.1} parent=0 // pred_check_branch
    %23 = sbr.rel (0) target = $region17
  $region16: #{scale_forward.1} parent=0 // pred_region
    _
  $region17: #{scale_forward.1} parent=0 // pred_fallthru
    _

</llo_original>
